<compile_context>
chip_gen: v5e
topology: v5e:2x2
jax: 0.10.0
libtpu: 0.0.40
codegen_flags: <defaults>
</compile_context>

<pallas_src>
import functools

import jax
import jax.numpy as jnp
from jax.experimental import pallas as pl
from jax.experimental.pallas import tpu as pltpu

EPS = 1e-5
LANE = 128


# ----------------------------- helpers --------------------------------------

def _round_up(x, m):
    return (x + m - 1) // m * m


def _pick_tile(total, cap):
    """Largest t <= cap dividing `total` with t % 8 == 0 (or t == total)."""
    # TODO(synk): arbitrary N*Ho*Wo needs a cdiv grid + masked tail tiles instead
    # of requiring an exact divisor.
    cap = max(1, min(cap, total))
    for t in range(cap, 0, -1):
        if total % t == 0 and (t % 8 == 0 or t == total):
            return t
    return total


def _bn_fold(gamma, beta, mean, var):
    scale = gamma / jnp.sqrt(var + EPS)
    shift = beta - mean * scale
    return scale, shift


# ----------------------------- Pallas kernels -------------------------------

def _row_stats_kernel(x_ref, s_ref, q_ref):
    """Per-row sum and sum-of-squares (rows = (n, c) pairs of the NCHW input)."""
    x = x_ref[...]                                          # (rt, H*W) f32
    s_ref[...] = jnp.sum(x, axis=1, keepdims=True)
    q_ref[...] = jnp.sum(x * x, axis=1, keepdims=True)


def _branch_kernel(x_ref, bn1_ref, w1_ref, ws_ref, t1_ref, sk_ref, st_ref):
    """t1 = relu(bn1(x)) @ W1 ; skip = x @ Ws ; plus per-tile BN2/BN-skip stats.

    Conv biases b1/bs are intentionally omitted: they cancel in the following
    batch-stat BatchNorms.
    """
    x = x_ref[...]                                          # (tm, Cpi) f32
    bn1 = bn1_ref[...]                                      # (2, Cpi): [scale; shift]
    h = jnp.maximum(x * bn1[0:1, :] + bn1[1:2, :], 0.0)     # bn1 + relu (f32)

    cd = w1_ref.dtype                                       # MXU compute dtype
    t1 = jnp.dot(h.astype(cd), w1_ref[...], preferred_element_type=jnp.float32)
    sk = jnp.dot(x.astype(cd), ws_ref[...], preferred_element_type=jnp.float32)

    t1_ref[...] = t1
    sk_ref[...] = sk

    # fused partial statistics for BN2 (over t1) and BN-skip (over skip);
    # rows: 0 = sum(t1), 1 = sum(t1^2), 2 = sum(skip), 3 = sum(skip^2)
    st_ref[...] = jnp.concatenate(
        [jnp.sum(t1, axis=0, keepdims=True),
         jnp.sum(t1 * t1, axis=0, keepdims=True),
         jnp.sum(sk, axis=0, keepdims=True),
         jnp.sum(sk * sk, axis=0, keepdims=True)],
        axis=0)[None, :, :]                                 # (1, 4, Cpo)


def _final_kernel(t1_ref, sk_ref, pc_ref, w2_ref, o_ref):
    """out = relu(bn2(t1)) @ W2 + b2 + bn_skip(skip)."""
    t1 = t1_ref[...]
    sk = sk_ref[...]
    pc = pc_ref[...]                                        # (5, Cpo): sc2, sh2, scs, shs, b2
    h = jnp.maximum(t1 * pc[0:1, :] + pc[1:2, :], 0.0)
    main = jnp.dot(h.astype(w2_ref.dtype), w2_ref[...],
                   preferred_element_type=jnp.float32) + pc[4:5, :]
    o_ref[...] = main + sk * pc[2:3, :] + pc[3:4, :]


# ----------------------------- wrappers --------------------------------------

def _channel_stats_nchw(x, tile_rows=256):
    """Batch mean / biased variance per channel of an NCHW tensor (Pallas reduce).

    Reads x in its native NCHW layout (view-reshape to (N*C, H*W)); no transpose
    pass over the full-resolution tensor is ever materialized.
    """
    N, C, H, W = x.shape
    rows, hw = N * C, H * W
    x2 = x.reshape(rows, hw)
    rt = _pick_tile(rows, tile_rows)
    s, q = pl.pallas_call(
        _row_stats_kernel,
        out_shape=(jax.ShapeDtypeStruct((rows, 1), jnp.float32),
                   jax.ShapeDtypeStruct((rows, 1), jnp.float32)),
        grid_spec=pltpu.PrefetchScalarGridSpec(
            num_scalar_prefetch=0,
            grid=(rows // rt,),
            in_specs=[pl.BlockSpec((rt, hw), lambda i: (i, 0))],
            out_specs=[pl.BlockSpec((rt, 1), lambda i: (i, 0)),
                       pl.BlockSpec((rt, 1), lambda i: (i, 0))],
        ),
        compiler_params=pltpu.CompilerParams(dimension_semantics=("parallel",)),
    )(x2)
    cnt = N * H * W
    s = s.reshape(N, C).sum(axis=0)
    q = q.reshape(N, C).sum(axis=0)
    mean = s / cnt
    # NOTE: E[x^2] - mean^2 can cancel badly for data with |mean| >> std; fine
    # for BN-style activations. Switch to a centered two-pass form if needed.
    var = q / cnt - mean * mean
    return mean, var


def _pad_vec(v, cp):
    return jnp.zeros((cp,), jnp.float32).at[: v.shape[0]].set(v.astype(jnp.float32))


@functools.partial(jax.jit, static_argnames=("stride", "tile_m", "compute_dtype"))
def residual_block(x, params, *, stride, tile_m=512, compute_dtype=jnp.float32):
    """x: [N, Cin, H, W] float32 (NCHW, like PyTorch). Returns [N, Cout, Ho, Wo]."""
    N, Cin, H, W = x.shape
    Cout = params["w1"].shape[1]
    Cpi = _round_up(Cin, LANE)          # lane-dense channel padding (no-op when
    Cpo = _round_up(Cout, LANE)         # channels are already multiples of 128)

    # --- BN1 statistics over the FULL input, read directly in NCHW layout ---
    mean1, var1 = _channel_stats_nchw(x)
    sc1, sh1 = _bn_fold(params["bn1_gamma"], params["bn1_beta"], mean1, var1)
    bn1 = jnp.zeros((2, Cpi), jnp.float32)
    bn1 = bn1.at[0, :Cin].set(sc1).at[1, :Cin].set(sh1)

    # --- strided 1x1-conv input: subsample + NCHW->NHWC + lane pad.
    # One fused XLA copy over the already-strided (stride^2 smaller) tensor. ---
    xs = x[:, :, ::stride, ::stride]
    Ho, Wo = xs.shape[2], xs.shape[3]
    M = N * Ho * Wo
    xs2 = jnp.transpose(xs, (0, 2, 3, 1)).reshape(M, Cin)
    xs2 = jnp.pad(xs2, ((0, 0), (0, Cpi - Cin)))

    # lane-padded weights, stored in the MXU compute dtype (bf16 halves HBM
    # weight traffic and unlocks the bf16 MXU rate).
    w1 = jnp.zeros((Cpi, Cpo), compute_dtype).at[:Cin, :Cout].set(
        params["w1"].astype(compute_dtype))
    ws = jnp.zeros((Cpi, Cpo), compute_dtype).at[:Cin, :Cout].set(
        params["ws"].astype(compute_dtype))
    w2 = jnp.zeros((Cpo, Cpo), compute_dtype).at[:Cout, :Cout].set(
        params["w2"].astype(compute_dtype))
    # NOTE: params["b1"] / params["bs"] are mathematically dead (cancelled by the
    # subsequent batch-stat BatchNorms) and are not loaded by the kernels.
    # TODO(synk): for ResNet-scale channels (>=1024) add a K-reduction grid axis
    # with a VMEM f32 accumulator (pl.when init/finalize) so the (Cin, Cout)
    # weight is tiled instead of fully resident per grid step (v7x VMEM budget).

    tm = _pick_tile(M, tile_m)
    G = M // tm

    # --- fused: relu(bn1(x)) @ W1 , x @ Ws , + per-tile BN2/BN-skip partial stats ---
    t1, sk, st = pl.pallas_call(
        _branch_kernel,
        out_shape=(jax.ShapeDtypeStruct((M, Cpo), jnp.float32),
                   jax.ShapeDtypeStruct((M, Cpo), jnp.float32),
                   jax.ShapeDtypeStruct((G, 4, Cpo), jnp.float32)),
        grid_spec=pltpu.PrefetchScalarGridSpec(
            num_scalar_prefetch=0,
            grid=(G,),
            in_specs=[
                pl.BlockSpec((tm, Cpi), lambda i: (i, 0)),
                pl.BlockSpec((2, Cpi), lambda i: (0, 0)),
                pl.BlockSpec((Cpi, Cpo), lambda i: (0, 0)),
                pl.BlockSpec((Cpi, Cpo), lambda i: (0, 0)),
            ],
            out_specs=[
                pl.BlockSpec((tm, Cpo), lambda i: (i, 0)),
                pl.BlockSpec((tm, Cpo), lambda i: (i, 0)),
                pl.BlockSpec((1, 4, Cpo), lambda i: (i, 0, 0)),
            ],
        ),
        compiler_params=pltpu.CompilerParams(dimension_semantics=("parallel",)),
    )(xs2, bn1, w1, ws)

    # --- fold BN2 / BN-skip from the fused partial statistics (tiny XLA ops) ---
    st = jnp.sum(st, axis=0)                                # (4, Cpo)
    mean2 = st[0] / M
    var2 = st[1] / M - mean2 * mean2
    means = st[2] / M
    vars_ = st[3] / M - means * means
    sc2, sh2 = _bn_fold(_pad_vec(params["bn2_gamma"], Cpo),
                        _pad_vec(params["bn2_beta"], Cpo), mean2, var2)
    scs, shs = _bn_fold(_pad_vec(params["bns_gamma"], Cpo),
                        _pad_vec(params["bns_beta"], Cpo), means, vars_)
    pc = jnp.stack([sc2, sh2, scs, shs, _pad_vec(params["b2"], Cpo)], axis=0)

    # --- fused: relu(bn2(t1)) @ W2 + b2 + bn_skip(skip) ---
    outp = pl.pallas_call(
        _final_kernel,
        out_shape=jax.ShapeDtypeStruct((M, Cpo), jnp.float32),
        grid_spec=pltpu.PrefetchScalarGridSpec(
            num_scalar_prefetch=0,
            grid=(G,),
            in_specs=[
                pl.BlockSpec((tm, Cpo), lambda i: (i, 0)),
                pl.BlockSpec((tm, Cpo), lambda i: (i, 0)),
                pl.BlockSpec((5, Cpo), lambda i: (0, 0)),
                pl.BlockSpec((Cpo, Cpo), lambda i: (0, 0)),
            ],
            out_specs=pl.BlockSpec((tm, Cpo), lambda i: (i, 0)),
        ),
        compiler_params=pltpu.CompilerParams(dimension_semantics=("parallel",)),
    )(t1, sk, pc, w2)

    out = outp[:, :Cout].reshape(N, Ho, Wo, Cout)
    return jnp.transpose(out, (0, 3, 1, 2))                 # back to NCHW


# ----------------------------- pure-JAX reference ----------------------------

def _ref_forward(x, params, stride):
    def bn(x, g, b):
        mean = x.mean(axis=(0, 2, 3))
        var = x.var(axis=(0, 2, 3))                         # biased, like PyTorch fwd
        inv = 1.0 / jnp.sqrt(var + EPS)
        return ((x - mean[None, :, None, None]) * inv[None, :, None, None]
                * g[None, :, None, None] + b[None, :, None, None])

    def conv1x1(x, w, b, s=1):
        xs = x[:, :, ::s, ::s]
        return jnp.einsum("nchw,co->nohw", xs, w) + b[None, :, None, None]

    h = jnp.maximum(bn(x, params["bn1_gamma"], params["bn1_beta"]), 0.0)
    h = conv1x1(h, params["w1"], params["b1"], stride)
    h = jnp.maximum(bn(h, params["bn2_gamma"], params["bn2_beta"]), 0.0)
    h = conv1x1(h, params["w2"], params["b2"], 1)
    s = conv1x1(x, params["ws"], params["bs"], stride)
    s = bn(s, params["bns_gamma"], params["bns_beta"])
    return h + s


# ----------------------------- main -------------------------------------------

if __name__ == "__main__":
    key = jax.random.PRNGKey(0)
    N, Cin, H, W = 2, 4, 16, 16
    Cout, stride = 8, 2
    # `padding` ctor arg is unused by the PyTorch module (convs use padding=0).

    keys = jax.random.split(key, 13)
    params = {
        # conv weights stored as [Cin, Cout]  (== PyTorch weight[:, :, 0, 0].T)
        "w1": jax.random.normal(keys[0], (Cin, Cout), jnp.float32) * 0.2,
        "b1": jax.random.normal(keys[1], (Cout,), jnp.float32) * 0.1,
        "w2": jax.random.normal(keys[2], (Cout, Cout), jnp.float32) * 0.2,
        "b2": jax.random.normal(keys[3], (Cout,), jnp.float32) * 0.1,
        "ws": jax.random.normal(keys[4], (Cin, Cout), jnp.float32) * 0.2,
        "bs": jax.random.normal(keys[5], (Cout,), jnp.float32) * 0.1,
        # BatchNorm affine params (deterministic, non-trivial)
        "bn1_gamma": 1.0 + 0.1 * jax.random.normal(keys[6], (Cin,), jnp.float32),
        "bn1_beta": 0.1 * jax.random.normal(keys[7], (Cin,), jnp.float32),
        "bn2_gamma": 1.0 + 0.1 * jax.random.normal(keys[8], (Cout,), jnp.float32),
        "bn2_beta": 0.1 * jax.random.normal(keys[9], (Cout,), jnp.float32),
        "bns_gamma": 1.0 + 0.1 * jax.random.normal(keys[10], (Cout,), jnp.float32),
        "bns_beta": 0.1 * jax.random.normal(keys[11], (Cout,), jnp.float32),
    }
    x = jax.random.normal(keys[12], (N, Cin, H, W), jnp.float32)

    ref = _ref_forward(x, params, stride)

    # exact-precision path (f32 MXU inputs) — tight check
    out = jax.block_until_ready(residual_block(x, params, stride=stride))
    assert out.shape == ref.shape == (N, Cout, H // stride, W // stride)
    assert jnp.allclose(out, ref, atol=1e-4, rtol=1e-4), (
        float(jnp.max(jnp.abs(out - ref))))

    # production config per perf review (bf16 MXU inputs, f32 accumulation) — loose check
    out_bf = jax.block_until_ready(
        residual_block(x, params, stride=stride, compute_dtype=jnp.bfloat16))
    assert jnp.allclose(out_bf, ref, atol=5e-2, rtol=5e-2), (
        float(jnp.max(jnp.abs(out_bf - ref))))

    print("KERNEL_OK")
</pallas_src>

<mosaic_0001>
module attributes {stable_mosaic.version = 11 : i64} {
  func.func @_row_stats_kernel(%arg0: i32, %arg1: memref<8x256xf32, #tpu.memory_space<vmem>>, %arg2: memref<8x1xf32, #tpu.memory_space<vmem>>, %arg3: memref<8x1xf32, #tpu.memory_space<vmem>>) attributes {dimension_semantics = [#tpu.dimension_semantics<parallel>], iteration_bounds = array<i64: 1>, scalar_prefetch = 0 : i64, scratch_operands = 0 : i64, tpu.core_type = #tpu.core_type<tc>, window_params = [{transform_indices = @transform_0, window_bounds = array<i64: 8, 256>}, {transform_indices = @transform_1, window_bounds = array<i64: 8, 1>}, {transform_indices = @transform_2, window_bounds = array<i64: 8, 1>}]} {
    %c0 = arith.constant 0 : index
    %c0_0 = arith.constant 0 : index
    %0 = vector.load %arg1[%c0, %c0_0] : memref<8x256xf32, #tpu.memory_space<vmem>>, vector<8x256xf32>
    %cst = arith.constant dense<0.000000e+00> : vector<8xf32>
    %1 = vector.multi_reduction <add>, %0, %cst [1] : vector<8x256xf32> to vector<8xf32>
    %2 = vector.shape_cast %1 : vector<8xf32> to vector<8x1xf32>
    %c0_1 = arith.constant 0 : index
    %c0_2 = arith.constant 0 : index
    %3 = vector.load %arg2[%c0_1, %c0_2] : memref<8x1xf32, #tpu.memory_space<vmem>>, vector<8x1xf32>
    tpu.vector_store %arg2[%c0_1, %c0_2], %2 {strides = array<i32>} : memref<8x1xf32, #tpu.memory_space<vmem>>, vector<8x1xf32>,
    %4 = arith.mulf %0, %0 : vector<8x256xf32>
    %cst_3 = arith.constant dense<0.000000e+00> : vector<8xf32>
    %5 = vector.multi_reduction <add>, %4, %cst_3 [1] : vector<8x256xf32> to vector<8xf32>
    %6 = vector.shape_cast %5 : vector<8xf32> to vector<8x1xf32>
    %c0_4 = arith.constant 0 : index
    %c0_5 = arith.constant 0 : index
    %7 = vector.load %arg3[%c0_4, %c0_5] : memref<8x1xf32, #tpu.memory_space<vmem>>, vector<8x1xf32>
    tpu.vector_store %arg3[%c0_4, %c0_5], %6 {strides = array<i32>} : memref<8x1xf32, #tpu.memory_space<vmem>>, vector<8x1xf32>,
    return
  }
  func.func @transform_0(%arg0: i32) -> (i32, i32) {
    %c0_i32 = arith.constant 0 : i32
    %c0_i32_0 = arith.constant 0 : i32
    return %arg0, %c0_i32 : i32, i32
  }
  func.func @transform_1(%arg0: i32) -> (i32, i32) {
    %c0_i32 = arith.constant 0 : i32
    %c0_i32_0 = arith.constant 0 : i32
    return %arg0, %c0_i32 : i32, i32
  }
  func.func @transform_2(%arg0: i32) -> (i32, i32) {
    %c0_i32 = arith.constant 0 : i32
    %c0_i32_0 = arith.constant 0 : i32
    return %arg0, %c0_i32 : i32, i32
  }
}

module attributes {stable_mosaic.version = 11 : i64} {
  func.func @_branch_kernel(%arg0: i32, %arg1: memref<128x128xf32, #tpu.memory_space<vmem>>, %arg2: memref<2x128xf32, #tpu.memory_space<vmem>>, %arg3: memref<128x128xf32, #tpu.memory_space<vmem>>, %arg4: memref<128x128xf32, #tpu.memory_space<vmem>>, %arg5: memref<128x128xf32, #tpu.memory_space<vmem>>, %arg6: memref<128x128xf32, #tpu.memory_space<vmem>>, %arg7: memref<1x4x128xf32, #tpu.memory_space<vmem>>) attributes {dimension_semantics = [#tpu.dimension_semantics<parallel>], iteration_bounds = array<i64: 1>, scalar_prefetch = 0 : i64, scratch_operands = 0 : i64, tpu.core_type = #tpu.core_type<tc>, window_params = [{transform_indices = @transform_0, window_bounds = array<i64: 128, 128>}, {pipeline_mode = #tpu.pipeline_mode<synchronous>, transform_indices = @transform_1, window_bounds = array<i64: 2, 128>}, {pipeline_mode = #tpu.pipeline_mode<synchronous>, transform_indices = @transform_2, window_bounds = array<i64: 128, 128>}, {pipeline_mode = #tpu.pipeline_mode<synchronous>, transform_indices = @transform_3, window_bounds = array<i64: 128, 128>}, {transform_indices = @transform_4, window_bounds = array<i64: 128, 128>}, {transform_indices = @transform_5, window_bounds = array<i64: 128, 128>}, {transform_indices = @transform_6, window_bounds = array<i64: 1, 4, 128>}]} {
    %c0 = arith.constant 0 : index
    %c0_0 = arith.constant 0 : index
    %0 = vector.load %arg1[%c0, %c0_0] : memref<128x128xf32, #tpu.memory_space<vmem>>, vector<128x128xf32>
    %c0_1 = arith.constant 0 : index
    %c0_2 = arith.constant 0 : index
    %1 = vector.load %arg2[%c0_1, %c0_2] : memref<2x128xf32, #tpu.memory_space<vmem>>, vector<2x128xf32>
    %2 = vector.extract_strided_slice %1 {offsets = [0, 0], sizes = [1, 128], strides = [1, 1]} : vector<2x128xf32> to vector<1x128xf32>
    %3 = vector.broadcast %2 : vector<1x128xf32> to vector<128x128xf32>
    %4 = arith.mulf %0, %3 : vector<128x128xf32>
    %5 = vector.extract_strided_slice %1 {offsets = [1, 0], sizes = [1, 128], strides = [1, 1]} : vector<2x128xf32> to vector<1x128xf32>
    %6 = vector.broadcast %5 : vector<1x128xf32> to vector<128x128xf32>
    %7 = arith.addf %4, %6 : vector<128x128xf32>
    %cst = arith.constant 0.000000e+00 : f32
    %8 = vector.broadcast %cst : f32 to vector<128x128xf32>
    %9 = arith.maximumf %7, %8 : vector<128x128xf32>
    %c0_3 = arith.constant 0 : index
    %c0_4 = arith.constant 0 : index
    %10 = vector.load %arg3[%c0_3, %c0_4] : memref<128x128xf32, #tpu.memory_space<vmem>>, vector<128x128xf32>
    %cst_5 = arith.constant dense<0.000000e+00> : vector<128x128xf32>
    %11 = tpu.matmul %9, %10, %cst_5 {dimension_numbers = #tpu.dot_dimension_numbers<[1], [0], [0], [1], [0, 0, 1, 1], [], []>} : vector<128x128xf32>, vector<128x128xf32>, vector<128x128xf32> -> vector<128x128xf32>
    %c0_6 = arith.constant 0 : index
    %c0_7 = arith.constant 0 : index
    %12 = vector.load %arg4[%c0_6, %c0_7] : memref<128x128xf32, #tpu.memory_space<vmem>>, vector<128x128xf32>
    %cst_8 = arith.constant dense<0.000000e+00> : vector<128x128xf32>
    %13 = tpu.matmul %0, %12, %cst_8 {dimension_numbers = #tpu.dot_dimension_numbers<[1], [0], [0], [1], [0, 0, 1, 1], [], []>} : vector<128x128xf32>, vector<128x128xf32>, vector<128x128xf32> -> vector<128x128xf32>
    %c0_9 = arith.constant 0 : index
    %c0_10 = arith.constant 0 : index
    %14 = vector.load %arg5[%c0_9, %c0_10] : memref<128x128xf32, #tpu.memory_space<vmem>>, vector<128x128xf32>
    tpu.vector_store %arg5[%c0_9, %c0_10], %11 {strides = array<i32>} : memref<128x128xf32, #tpu.memory_space<vmem>>, vector<128x128xf32>,
    %c0_11 = arith.constant 0 : index
    %c0_12 = arith.constant 0 : index
    %15 = vector.load %arg6[%c0_11, %c0_12] : memref<128x128xf32, #tpu.memory_space<vmem>>, vector<128x128xf32>
    tpu.vector_store %arg6[%c0_11, %c0_12], %13 {strides = array<i32>} : memref<128x128xf32, #tpu.memory_space<vmem>>, vector<128x128xf32>,
    %cst_13 = arith.constant dense<0.000000e+00> : vector<128xf32>
    %16 = vector.multi_reduction <add>, %11, %cst_13 [0] : vector<128x128xf32> to vector<128xf32>
    %17 = vector.shape_cast %16 : vector<128xf32> to vector<1x128xf32>
    %18 = arith.mulf %11, %11 : vector<128x128xf32>
    %cst_14 = arith.constant dense<0.000000e+00> : vector<128xf32>
    %19 = vector.multi_reduction <add>, %18, %cst_14 [0] : vector<128x128xf32> to vector<128xf32>
    %20 = vector.shape_cast %19 : vector<128xf32> to vector<1x128xf32>
    %cst_15 = arith.constant dense<0.000000e+00> : vector<128xf32>
    %21 = vector.multi_reduction <add>, %13, %cst_15 [0] : vector<128x128xf32> to vector<128xf32>
    %22 = vector.shape_cast %21 : vector<128xf32> to vector<1x128xf32>
    %23 = arith.mulf %13, %13 : vector<128x128xf32>
    %cst_16 = arith.constant dense<0.000000e+00> : vector<128xf32>
    %24 = vector.multi_reduction <add>, %23, %cst_16 [0] : vector<128x128xf32> to vector<128xf32>
    %25 = vector.shape_cast %24 : vector<128xf32> to vector<1x128xf32>
    %26 = tpu.concatenate %17, %20, %22, %25 in 0 : vector<1x128xf32>, vector<1x128xf32>, vector<1x128xf32>, vector<1x128xf32> -> vector<4x128xf32>
    %27 = vector.shape_cast %26 : vector<4x128xf32> to vector<1x4x128xf32>
    %c0_17 = arith.constant 0 : index
    %c0_18 = arith.constant 0 : index
    %c0_19 = arith.constant 0 : index
    %28 = vector.load %arg7[%c0_17, %c0_18, %c0_19] : memref<1x4x128xf32, #tpu.memory_space<vmem>>, vector<1x4x128xf32>
    tpu.vector_store %arg7[%c0_17, %c0_18, %c0_19], %27 {strides = array<i32>} : memref<1x4x128xf32, #tpu.memory_space<vmem>>, vector<1x4x128xf32>,
    return
  }
  func.func @transform_0(%arg0: i32) -> (i32, i32) {
    %c0_i32 = arith.constant 0 : i32
    %c0_i32_0 = arith.constant 0 : i32
    return %arg0, %c0_i32 : i32, i32
  }
  func.func @transform_1(%arg0: i32) -> (i32, i32) {
    %c0_i32 = arith.constant 0 : i32
    %c0_i32_0 = arith.constant 0 : i32
    %c0_i32_1 = arith.constant 0 : i32
    return %c0_i32, %c0_i32_0 : i32, i32
  }
  func.func @transform_2(%arg0: i32) -> (i32, i32) {
    %c0_i32 = arith.constant 0 : i32
    %c0_i32_0 = arith.constant 0 : i32
    %c0_i32_1 = arith.constant 0 : i32
    return %c0_i32, %c0_i32_0 : i32, i32
  }
  func.func @transform_3(%arg0: i32) -> (i32, i32) {
    %c0_i32 = arith.constant 0 : i32
    %c0_i32_0 = arith.constant 0 : i32
    %c0_i32_1 = arith.constant 0 : i32
    return %c0_i32, %c0_i32_0 : i32, i32
  }
  func.func @transform_4(%arg0: i32) -> (i32, i32) {
    %c0_i32 = arith.constant 0 : i32
    %c0_i32_0 = arith.constant 0 : i32
    return %arg0, %c0_i32 : i32, i32
  }
  func.func @transform_5(%arg0: i32) -> (i32, i32) {
    %c0_i32 = arith.constant 0 : i32
    %c0_i32_0 = arith.constant 0 : i32
    return %arg0, %c0_i32 : i32, i32
  }
  func.func @transform_6(%arg0: i32) -> (i32, i32, i32) {
    %c0_i32 = arith.constant 0 : i32
    %c0_i32_0 = arith.constant 0 : i32
    %c0_i32_1 = arith.constant 0 : i32
    return %arg0, %c0_i32, %c0_i32_0 : i32, i32, i32
  }
}

module attributes {stable_mosaic.version = 11 : i64} {
  func.func @_final_kernel(%arg0: i32, %arg1: memref<128x128xf32, #tpu.memory_space<vmem>>, %arg2: memref<128x128xf32, #tpu.memory_space<vmem>>, %arg3: memref<5x128xf32, #tpu.memory_space<vmem>>, %arg4: memref<128x128xf32, #tpu.memory_space<vmem>>, %arg5: memref<128x128xf32, #tpu.memory_space<vmem>>) attributes {dimension_semantics = [#tpu.dimension_semantics<parallel>], iteration_bounds = array<i64: 1>, scalar_prefetch = 0 : i64, scratch_operands = 0 : i64, tpu.core_type = #tpu.core_type<tc>, window_params = [{transform_indices = @transform_0, window_bounds = array<i64: 128, 128>}, {transform_indices = @transform_1, window_bounds = array<i64: 128, 128>}, {pipeline_mode = #tpu.pipeline_mode<synchronous>, transform_indices = @transform_2, window_bounds = array<i64: 5, 128>}, {pipeline_mode = #tpu.pipeline_mode<synchronous>, transform_indices = @transform_3, window_bounds = array<i64: 128, 128>}, {transform_indices = @transform_4, window_bounds = array<i64: 128, 128>}]} {
    %c0 = arith.constant 0 : index
    %c0_0 = arith.constant 0 : index
    %0 = vector.load %arg1[%c0, %c0_0] : memref<128x128xf32, #tpu.memory_space<vmem>>, vector<128x128xf32>
    %c0_1 = arith.constant 0 : index
    %c0_2 = arith.constant 0 : index
    %1 = vector.load %arg2[%c0_1, %c0_2] : memref<128x128xf32, #tpu.memory_space<vmem>>, vector<128x128xf32>
    %c0_3 = arith.constant 0 : index
    %c0_4 = arith.constant 0 : index
    %2 = vector.load %arg3[%c0_3, %c0_4] : memref<5x128xf32, #tpu.memory_space<vmem>>, vector<5x128xf32>
    %3 = vector.extract_strided_slice %2 {offsets = [0, 0], sizes = [1, 128], strides = [1, 1]} : vector<5x128xf32> to vector<1x128xf32>
    %4 = vector.broadcast %3 : vector<1x128xf32> to vector<128x128xf32>
    %5 = arith.mulf %0, %4 : vector<128x128xf32>
    %6 = vector.extract_strided_slice %2 {offsets = [1, 0], sizes = [1, 128], strides = [1, 1]} : vector<5x128xf32> to vector<1x128xf32>
    %7 = vector.broadcast %6 : vector<1x128xf32> to vector<128x128xf32>
    %8 = arith.addf %5, %7 : vector<128x128xf32>
    %cst = arith.constant 0.000000e+00 : f32
    %9 = vector.broadcast %cst : f32 to vector<128x128xf32>
    %10 = arith.maximumf %8, %9 : vector<128x128xf32>
    %c0_5 = arith.constant 0 : index
    %c0_6 = arith.constant 0 : index
    %11 = vector.load %arg4[%c0_5, %c0_6] : memref<128x128xf32, #tpu.memory_space<vmem>>, vector<128x128xf32>
    %cst_7 = arith.constant dense<0.000000e+00> : vector<128x128xf32>
    %12 = tpu.matmul %10, %11, %cst_7 {dimension_numbers = #tpu.dot_dimension_numbers<[1], [0], [0], [1], [0, 0, 1, 1], [], []>} : vector<128x128xf32>, vector<128x128xf32>, vector<128x128xf32> -> vector<128x128xf32>
    %13 = vector.extract_strided_slice %2 {offsets = [4, 0], sizes = [1, 128], strides = [1, 1]} : vector<5x128xf32> to vector<1x128xf32>
    %14 = vector.broadcast %13 : vector<1x128xf32> to vector<128x128xf32>
    %15 = arith.addf %12, %14 : vector<128x128xf32>
    %16 = vector.extract_strided_slice %2 {offsets = [2, 0], sizes = [1, 128], strides = [1, 1]} : vector<5x128xf32> to vector<1x128xf32>
    %17 = vector.broadcast %16 : vector<1x128xf32> to vector<128x128xf32>
    %18 = arith.mulf %1, %17 : vector<128x128xf32>
    %19 = arith.addf %15, %18 : vector<128x128xf32>
    %20 = vector.extract_strided_slice %2 {offsets = [3, 0], sizes = [1, 128], strides = [1, 1]} : vector<5x128xf32> to vector<1x128xf32>
    %21 = vector.broadcast %20 : vector<1x128xf32> to vector<128x128xf32>
    %22 = arith.addf %19, %21 : vector<128x128xf32>
    %c0_8 = arith.constant 0 : index
    %c0_9 = arith.constant 0 : index
    %23 = vector.load %arg5[%c0_8, %c0_9] : memref<128x128xf32, #tpu.memory_space<vmem>>, vector<128x128xf32>
    tpu.vector_store %arg5[%c0_8, %c0_9], %22 {strides = array<i32>} : memref<128x128xf32, #tpu.memory_space<vmem>>, vector<128x128xf32>,
    return
  }
  func.func @transform_0(%arg0: i32) -> (i32, i32) {
    %c0_i32 = arith.constant 0 : i32
    %c0_i32_0 = arith.constant 0 : i32
    return %arg0, %c0_i32 : i32, i32
  }
  func.func @transform_1(%arg0: i32) -> (i32, i32) {
    %c0_i32 = arith.constant 0 : i32
    %c0_i32_0 = arith.constant 0 : i32
    return %arg0, %c0_i32 : i32, i32
  }
  func.func @transform_2(%arg0: i32) -> (i32, i32) {
    %c0_i32 = arith.constant 0 : i32
    %c0_i32_0 = arith.constant 0 : i32
    %c0_i32_1 = arith.constant 0 : i32
    return %c0_i32, %c0_i32_0 : i32, i32
  }
  func.func @transform_3(%arg0: i32) -> (i32, i32) {
    %c0_i32 = arith.constant 0 : i32
    %c0_i32_0 = arith.constant 0 : i32
    %c0_i32_1 = arith.constant 0 : i32
    return %c0_i32, %c0_i32_0 : i32, i32
  }
  func.func @transform_4(%arg0: i32) -> (i32, i32) {
    %c0_i32 = arith.constant 0 : i32
    %c0_i32_0 = arith.constant 0 : i32
    return %arg0, %c0_i32 : i32, i32
  }
}

</mosaic_0001>

<llo_original>
// kernel: residual_block.3
$region0: #{residual_block.3}
  #allocation0 [shape = 'u32[]', space=smem, size = 0x4, offset = 0x4, fixed_abs, tag = 'smem constant byte address 0x4 - core index']
  #allocation1 [shape = 'u32[72,128]{1,0:T(1,128)}', space=vmem, size = 0x9000, scoped, tag = 'internal scratch']
  %s0 = inlined_call_operand.vmem [shape: f32[8,256], index: 0, kind: input, shape index: {}]
  %s1 = inlined_call_operand.vmem [shape: f32[8,1], index: 1, kind: output, shape index: {0}]
  %s2 = inlined_call_operand.vmem [shape: f32[8,1], index: 2, kind: output, shape index: {1}]
  %3 = xla_tuple %s1, %s2
  %s4 = sld [smem:[#allocation0]]
  $region22: #{residual_block.3} parent=0
    _
  %s6 = ssub.s32 1, %s4
  %s7 = scalar_select 0, %s6, %s4
  // Predicated region
  $region2: #{residual_block.3} parent=0 // pred_check
    _
  $region3: #{residual_block.3} parent=0 // pred_check_branch
    %9 = sbr.rel (0) target = $region5
  $region4: #{residual_block.3} parent=0 // pred_region
    _
  $region5: #{residual_block.3} parent=0 // pred_fallthru
    _
  %v10 = vld [vmem:[%s0] sm:$0xff]
  %v11 = vld [vmem:[%s0 + $0x8] sm:$0xff]
  %v12 = vadd.f32 %v10, %v11
  %13 = vadd.xlane.f32.xlu0 %v12
  %v14 = vpop.xlane.xlu0 %13
  %vm15 = vcmask 7168
  %16 = vst.msk [vmem:[%s1] sm:$0xff] %vm15, %v14
  %v17 = vmul.f32 %v10, %v10
  %v18 = vmul.f32 %v11, %v11
  %v19 = vadd.f32 %v17, %v18
  %20 = vadd.xlane.f32.xlu0 %v19
  %v21 = vpop.xlane.xlu0 %20
  %22 = vst.msk [vmem:[%s2] sm:$0xff] %vm15, %v21
  // Predicated region
  $region6: #{residual_block.3} parent=0 // pred_check
    _
  $region7: #{residual_block.3} parent=0 // pred_check_branch
    %24 = sbr.rel (0) target = $region9
  $region8: #{residual_block.3} parent=0 // pred_region
    _
  $region9: #{residual_block.3} parent=0 // pred_fallthru
    _
  // Predicated region
  $region10: #{residual_block.3} parent=0 // pred_check
    _
  $region11: #{residual_block.3} parent=0 // pred_check_branch
    %26 = sbr.rel (0) target = $region13
  $region12: #{residual_block.3} parent=0 // pred_region
    _
  $region13: #{residual_block.3} parent=0 // pred_fallthru
    _
  // Predicated region
  $region14: #{residual_block.3} parent=0 // pred_check
    _
  $region15: #{residual_block.3} parent=0 // pred_check_branch
    %28 = sbr.rel (0) target = $region17
  $region16: #{residual_block.3} parent=0 // pred_region
    _
  $region17: #{residual_block.3} parent=0 // pred_fallthru
    _
  // Predicated region
  $region18: #{residual_block.3} parent=0 // pred_check
    _
  $region19: #{residual_block.3} parent=0 // pred_check_branch
    %30 = sbr.rel (0) target = $region21
  $region20: #{residual_block.3} parent=0 // pred_region
    _
  $region21: #{residual_block.3} parent=0 // pred_fallthru
    _

// kernel: residual_block.4
$region0: #{residual_block.4}
  #allocation0 [shape = 'u32[]', space=smem, size = 0x4, offset = 0x4, fixed_abs, tag = 'smem constant byte address 0x4 - core index']
  #allocation1 [shape = 'u32[72,128]{1,0:T(1,128)}', space=vmem, size = 0x9000, scoped, tag = 'internal scratch']
  %s0 = inlined_call_operand.vmem [shape: f32[128,128], index: 0, kind: input, shape index: {}]
  %s1 = inlined_call_operand.vmem [shape: f32[2,128], index: 1, kind: input, shape index: {}]
  %s2 = inlined_call_operand.vmem [shape: f32[128,128], index: 2, kind: input, shape index: {}]
  %s3 = inlined_call_operand.vmem [shape: f32[128,128], index: 3, kind: input, shape index: {}]
  %s4 = inlined_call_operand.vmem [shape: f32[128,128], index: 4, kind: output, shape index: {0}]
  %s5 = inlined_call_operand.vmem [shape: f32[128,128], index: 5, kind: output, shape index: {1}]
  %s6 = inlined_call_operand.vmem [shape: f32[1,4,128], index: 6, kind: output, shape index: {2}]
  %7 = xla_tuple %s4, %s5, %s6
  %s8 = sld [smem:[#allocation0]]
  $region42: #{residual_block.4} parent=0
    _
  %s10 = ssub.s32 1, %s8
  %s11 = scalar_select 0, %s10, %s8
  // Predicated region
  $region2: #{residual_block.4} parent=0 // pred_check
    _
  $region3: #{residual_block.4} parent=0 // pred_check_branch
    %13 = sbr.rel (0) target = $region5
  $region4: #{residual_block.4} parent=0 // pred_region
    _
  $region5: #{residual_block.4} parent=0 // pred_fallthru
    _
  // Predicated region
  $region6: #{residual_block.4} parent=0 // pred_check
    _
  $region7: #{residual_block.4} parent=0 // pred_check_branch
    %15 = sbr.rel (0) target = $region9
  $region8: #{residual_block.4} parent=0 // pred_region
    _
  $region9: #{residual_block.4} parent=0 // pred_fallthru
    _
  // Predicated region
  $region10: #{residual_block.4} parent=0 // pred_check
    _
  $region11: #{residual_block.4} parent=0 // pred_check_branch
    %17 = sbr.rel (0) target = $region13
  $region12: #{residual_block.4} parent=0 // pred_region
    _
  $region13: #{residual_block.4} parent=0 // pred_fallthru
    _
  // Predicated region
  $region14: #{residual_block.4} parent=0 // pred_check
    _
  $region15: #{residual_block.4} parent=0 // pred_check_branch
    %19 = sbr.rel (0) target = $region17
  $region16: #{residual_block.4} parent=0 // pred_region
    _
  $region17: #{residual_block.4} parent=0 // pred_fallthru
    _
  %v20 = vld [vmem:[%s0] sm:$0xff]
  %v21 = vld [vmem:[%s0 + $0x8] sm:$0xff]
  %v22 = vld [vmem:[%s0 + $0x10] sm:$0xff]
  %v23 = vld [vmem:[%s0 + $0x18] sm:$0xff]
  %v24 = vld [vmem:[%s0 + $0x20] sm:$0xff]
  %v25 = vld [vmem:[%s0 + $0x28] sm:$0xff]
  %v26 = vld [vmem:[%s0 + $0x30] sm:$0xff]
  %v27 = vld [vmem:[%s0 + $0x38] sm:$0xff]
  %v28 = vld [vmem:[%s0 + $0x40] sm:$0xff]
  %v29 = vld [vmem:[%s0 + $0x48] sm:$0xff]
  %v30 = vld [vmem:[%s0 + $0x50] sm:$0xff]
  %v31 = vld [vmem:[%s0 + $0x58] sm:$0xff]
  %v32 = vld [vmem:[%s0 + $0x60] sm:$0xff]
  %v33 = vld [vmem:[%s0 + $0x68] sm:$0xff]
  %v34 = vld [vmem:[%s0 + $0x70] sm:$0xff]
  %v35 = vld [vmem:[%s0 + $0x78] sm:$0xff]
  %v36 = vld [vmem:[%s1] sm:$0x3]
  %v37 = vperm.slane %v36, 0
  %v38 = vmul.f32 %v20, %v37
  %v39 = vmul.f32 %v21, %v37
  %v40 = vmul.f32 %v22, %v37
  %v41 = vmul.f32 %v23, %v37
  %v42 = vmul.f32 %v24, %v37
  %v43 = vmul.f32 %v25, %v37
  %v44 = vmul.f32 %v26, %v37
  %v45 = vmul.f32 %v27, %v37
  %v46 = vmul.f32 %v28, %v37
  %v47 = vmul.f32 %v29, %v37
  %v48 = vmul.f32 %v30, %v37
  %v49 = vmul.f32 %v31, %v37
  %v50 = vmul.f32 %v32, %v37
  %v51 = vmul.f32 %v33, %v37
  %v52 = vmul.f32 %v34, %v37
  %v53 = vmul.f32 %v35, %v37
  %v54 = vperm.slane %v36, 1
  %v55 = vadd.f32 %v38, %v54
  %v56 = vadd.f32 %v39, %v54
  %v57 = vadd.f32 %v40, %v54
  %v58 = vadd.f32 %v41, %v54
  %v59 = vadd.f32 %v42, %v54
  %v60 = vadd.f32 %v43, %v54
  %v61 = vadd.f32 %v44, %v54
  %v62 = vadd.f32 %v45, %v54
  %v63 = vadd.f32 %v46, %v54
  %v64 = vadd.f32 %v47, %v54
  %v65 = vadd.f32 %v48, %v54
  %v66 = vadd.f32 %v49, %v54
  %v67 = vadd.f32 %v50, %v54
  %v68 = vadd.f32 %v51, %v54
  %v69 = vadd.f32 %v52, %v54
  %v70 = vadd.f32 %v53, %v54
  %v71 = vmax.f32 %v55, 0.0
  %v72 = vmax.f32 %v56, 0.0
  %v73 = vmax.f32 %v57, 0.0
  %v74 = vmax.f32 %v58, 0.0
  %v75 = vmax.f32 %v59, 0.0
  %v76 = vmax.f32 %v60, 0.0
  %v77 = vmax.f32 %v61, 0.0
  %v78 = vmax.f32 %v62, 0.0
  %v79 = vmax.f32 %v63, 0.0
  %v80 = vmax.f32 %v64, 0.0
  %v81 = vmax.f32 %v65, 0.0
  %v82 = vmax.f32 %v66, 0.0
  %v83 = vmax.f32 %v67, 0.0
  %v84 = vmax.f32 %v68, 0.0
  %v85 = vmax.f32 %v69, 0.0
  %v86 = vmax.f32 %v70, 0.0
  %v87 = vld [vmem:[%s2] sm:$0xff]
  %v88 = vld [vmem:[%s2 + $0x8] sm:$0xff]
  %v89 = vld [vmem:[%s2 + $0x10] sm:$0xff]
  %v90 = vld [vmem:[%s2 + $0x18] sm:$0xff]
  %v91 = vld [vmem:[%s2 + $0x20] sm:$0xff]
  %v92 = vld [vmem:[%s2 + $0x28] sm:$0xff]
  %v93 = vld [vmem:[%s2 + $0x30] sm:$0xff]
  %v94 = vld [vmem:[%s2 + $0x38] sm:$0xff]
  %v95 = vld [vmem:[%s2 + $0x40] sm:$0xff]
  %v96 = vld [vmem:[%s2 + $0x48] sm:$0xff]
  %v97 = vld [vmem:[%s2 + $0x50] sm:$0xff]
  %v98 = vld [vmem:[%s2 + $0x58] sm:$0xff]
  %v99 = vld [vmem:[%s2 + $0x60] sm:$0xff]
  %v100 = vld [vmem:[%s2 + $0x68] sm:$0xff]
  %v101 = vld [vmem:[%s2 + $0x70] sm:$0xff]
  %v102 = vld [vmem:[%s2 + $0x78] sm:$0xff]
  %103 = vmatpush.msra.mxu0 %v102
  %104 = vmatpush.msra.mxu0 %v101
  %105 = vmatpush.msra.mxu0 %v100
  %106 = vmatpush.msra.mxu0 %v99
  %107 = vmatpush.msra.mxu0 %v98
  %108 = vmatpush.msra.mxu0 %v97
  %109 = vmatpush.msra.mxu0 %v96
  %110 = vmatpush.msra.mxu0 %v95
  %111 = vmatpush.msra.mxu0 %v94
  %112 = vmatpush.msra.mxu0 %v93
  %113 = vmatpush.msra.mxu0 %v92
  %114 = vmatpush.msra.mxu0 %v91
  %115 = vmatpush.msra.mxu0 %v90
  %116 = vmatpush.msra.mxu0 %v89
  %117 = vmatpush.msra.mxu0 %v88
  %118 = vmatpush.msra.mxu0 %v87
  %119 = vmatmul.f32.gmra.mxu0 %v71
  %v120 = vpop.f32.mrf.mxu0
  %v121 = vadd.f32 0.0, %v120
  %122 = vmatmul.f32.gmra.mxu0 %v72
  %v123 = vpop.f32.mrf.mxu0
  %v124 = vadd.f32 0.0, %v123
  %125 = vmatmul.f32.gmra.mxu0 %v73
  %v126 = vpop.f32.mrf.mxu0
  %v127 = vadd.f32 0.0, %v126
  %128 = vmatmul.f32.gmra.mxu0 %v74
  %v129 = vpop.f32.mrf.mxu0
  %v130 = vadd.f32 0.0, %v129
  %131 = vmatmul.f32.gmra.mxu0 %v75
  %v132 = vpop.f32.mrf.mxu0
  %v133 = vadd.f32 0.0, %v132
  %134 = vmatmul.f32.gmra.mxu0 %v76
  %v135 = vpop.f32.mrf.mxu0
  %v136 = vadd.f32 0.0, %v135
  %137 = vmatmul.f32.gmra.mxu0 %v77
  %v138 = vpop.f32.mrf.mxu0
  %v139 = vadd.f32 0.0, %v138
  %140 = vmatmul.f32.gmra.mxu0 %v78
  %v141 = vpop.f32.mrf.mxu0
  %v142 = vadd.f32 0.0, %v141
  %143 = vmatmul.f32.gmra.mxu0 %v79
  %v144 = vpop.f32.mrf.mxu0
  %v145 = vadd.f32 0.0, %v144
  %146 = vmatmul.f32.gmra.mxu0 %v80
  %v147 = vpop.f32.mrf.mxu0
  %v148 = vadd.f32 0.0, %v147
  %149 = vmatmul.f32.gmra.mxu0 %v81
  %v150 = vpop.f32.mrf.mxu0
  %v151 = vadd.f32 0.0, %v150
  %152 = vmatmul.f32.gmra.mxu0 %v82
  %v153 = vpop.f32.mrf.mxu0
  %v154 = vadd.f32 0.0, %v153
  %155 = vmatmul.f32.gmra.mxu0 %v83
  %v156 = vpop.f32.mrf.mxu0
  %v157 = vadd.f32 0.0, %v156
  %158 = vmatmul.f32.gmra.mxu0 %v84
  %v159 = vpop.f32.mrf.mxu0
  %v160 = vadd.f32 0.0, %v159
  %161 = vmatmul.f32.gmra.mxu0 %v85
  %v162 = vpop.f32.mrf.mxu0
  %v163 = vadd.f32 0.0, %v162
  %164 = vmatmul.f32.gmra.mxu0 %v86
  %v165 = vpop.f32.mrf.mxu0
  %v166 = vadd.f32 0.0, %v165
  %167 = vdwg.mxu0
  %v168 = vld [vmem:[%s3] sm:$0xff]
  %v169 = vld [vmem:[%s3 + $0x8] sm:$0xff]
  %v170 = vld [vmem:[%s3 + $0x10] sm:$0xff]
  %v171 = vld [vmem:[%s3 + $0x18] sm:$0xff]
  %v172 = vld [vmem:[%s3 + $0x20] sm:$0xff]
  %v173 = vld [vmem:[%s3 + $0x28] sm:$0xff]
  %v174 = vld [vmem:[%s3 + $0x30] sm:$0xff]
  %v175 = vld [vmem:[%s3 + $0x38] sm:$0xff]
  %v176 = vld [vmem:[%s3 + $0x40] sm:$0xff]
  %v177 = vld [vmem:[%s3 + $0x48] sm:$0xff]
  %v178 = vld [vmem:[%s3 + $0x50] sm:$0xff]
  %v179 = vld [vmem:[%s3 + $0x58] sm:$0xff]
  %v180 = vld [vmem:[%s3 + $0x60] sm:$0xff]
  %v181 = vld [vmem:[%s3 + $0x68] sm:$0xff]
  %v182 = vld [vmem:[%s3 + $0x70] sm:$0xff]
  %v183 = vld [vmem:[%s3 + $0x78] sm:$0xff]
  %184 = vmatpush.msra.mxu0 %v183
  %185 = vmatpush.msra.mxu0 %v182
  %186 = vmatpush.msra.mxu0 %v181
  %187 = vmatpush.msra.mxu0 %v180
  %188 = vmatpush.msra.mxu0 %v179
  %189 = vmatpush.msra.mxu0 %v178
  %190 = vmatpush.msra.mxu0 %v177
  %191 = vmatpush.msra.mxu0 %v176
  %192 = vmatpush.msra.mxu0 %v175
  %193 = vmatpush.msra.mxu0 %v174
  %194 = vmatpush.msra.mxu0 %v173
  %195 = vmatpush.msra.mxu0 %v172
  %196 = vmatpush.msra.mxu0 %v171
  %197 = vmatpush.msra.mxu0 %v170
  %198 = vmatpush.msra.mxu0 %v169
  %199 = vmatpush.msra.mxu0 %v168
  %200 = vmatmul.f32.gmra.mxu0 %v20
  %v201 = vpop.f32.mrf.mxu0
  %v202 = vadd.f32 0.0, %v201
  %203 = vmatmul.f32.gmra.mxu0 %v21
  %v204 = vpop.f32.mrf.mxu0
  %v205 = vadd.f32 0.0, %v204
  %206 = vmatmul.f32.gmra.mxu0 %v22
  %v207 = vpop.f32.mrf.mxu0
  %v208 = vadd.f32 0.0, %v207
  %209 = vmatmul.f32.gmra.mxu0 %v23
  %v210 = vpop.f32.mrf.mxu0
  %v211 = vadd.f32 0.0, %v210
  %212 = vmatmul.f32.gmra.mxu0 %v24
  %v213 = vpop.f32.mrf.mxu0
  %v214 = vadd.f32 0.0, %v213
  %215 = vmatmul.f32.gmra.mxu0 %v25
  %v216 = vpop.f32.mrf.mxu0
  %v217 = vadd.f32 0.0, %v216
  %218 = vmatmul.f32.gmra.mxu0 %v26
  %v219 = vpop.f32.mrf.mxu0
  %v220 = vadd.f32 0.0, %v219
  %221 = vmatmul.f32.gmra.mxu0 %v27
  %v222 = vpop.f32.mrf.mxu0
  %v223 = vadd.f32 0.0, %v222
  %224 = vmatmul.f32.gmra.mxu0 %v28
  %v225 = vpop.f32.mrf.mxu0
  %v226 = vadd.f32 0.0, %v225
  %227 = vmatmul.f32.gmra.mxu0 %v29
  %v228 = vpop.f32.mrf.mxu0
  %v229 = vadd.f32 0.0, %v228
  %230 = vmatmul.f32.gmra.mxu0 %v30
  %v231 = vpop.f32.mrf.mxu0
  %v232 = vadd.f32 0.0, %v231
  %233 = vmatmul.f32.gmra.mxu0 %v31
  %v234 = vpop.f32.mrf.mxu0
  %v235 = vadd.f32 0.0, %v234
  %236 = vmatmul.f32.gmra.mxu0 %v32
  %v237 = vpop.f32.mrf.mxu0
  %v238 = vadd.f32 0.0, %v237
  %239 = vmatmul.f32.gmra.mxu0 %v33
  %v240 = vpop.f32.mrf.mxu0
  %v241 = vadd.f32 0.0, %v240
  %242 = vmatmul.f32.gmra.mxu0 %v34
  %v243 = vpop.f32.mrf.mxu0
  %v244 = vadd.f32 0.0, %v243
  %245 = vmatmul.f32.gmra.mxu0 %v35
  %v246 = vpop.f32.mrf.mxu0
  %v247 = vadd.f32 0.0, %v246
  %248 = vdwg.mxu0
  %249 = vst [vmem:[%s4] sm:$0xff] %v121
  %250 = vst [vmem:[%s4 + $0x8] sm:$0xff] %v124
  %251 = vst [vmem:[%s4 + $0x10] sm:$0xff] %v127
  %252 = vst [vmem:[%s4 + $0x18] sm:$0xff] %v130
  %253 = vst [vmem:[%s4 + $0x20] sm:$0xff] %v133
  %254 = vst [vmem:[%s4 + $0x28] sm:$0xff] %v136
  %255 = vst [vmem:[%s4 + $0x30] sm:$0xff] %v139
  %256 = vst [vmem:[%s4 + $0x38] sm:$0xff] %v142
  %257 = vst [vmem:[%s4 + $0x40] sm:$0xff] %v145
  %258 = vst [vmem:[%s4 + $0x48] sm:$0xff] %v148
  %259 = vst [vmem:[%s4 + $0x50] sm:$0xff] %v151
  %260 = vst [vmem:[%s4 + $0x58] sm:$0xff] %v154
  %261 = vst [vmem:[%s4 + $0x60] sm:$0xff] %v157
  %262 = vst [vmem:[%s4 + $0x68] sm:$0xff] %v160
  %263 = vst [vmem:[%s4 + $0x70] sm:$0xff] %v163
  %264 = vst [vmem:[%s4 + $0x78] sm:$0xff] %v166
  %265 = vst [vmem:[%s5] sm:$0xff] %v202
  %266 = vst [vmem:[%s5 + $0x8] sm:$0xff] %v205
  %267 = vst [vmem:[%s5 + $0x10] sm:$0xff] %v208
  %268 = vst [vmem:[%s5 + $0x18] sm:$0xff] %v211
  %269 = vst [vmem:[%s5 + $0x20] sm:$0xff] %v214
  %270 = vst [vmem:[%s5 + $0x28] sm:$0xff] %v217
  %271 = vst [vmem:[%s5 + $0x30] sm:$0xff] %v220
  %272 = vst [vmem:[%s5 + $0x38] sm:$0xff] %v223
  %273 = vst [vmem:[%s5 + $0x40] sm:$0xff] %v226
  %274 = vst [vmem:[%s5 + $0x48] sm:$0xff] %v229
  %275 = vst [vmem:[%s5 + $0x50] sm:$0xff] %v232
  %276 = vst [vmem:[%s5 + $0x58] sm:$0xff] %v235
  %277 = vst [vmem:[%s5 + $0x60] sm:$0xff] %v238
  %278 = vst [vmem:[%s5 + $0x68] sm:$0xff] %v241
  %279 = vst [vmem:[%s5 + $0x70] sm:$0xff] %v244
  %280 = vst [vmem:[%s5 + $0x78] sm:$0xff] %v247
  %v281 = vadd.f32 %v121, %v124
  %v282 = vadd.f32 %v281, %v127
  %v283 = vadd.f32 %v282, %v130
  %v284 = vadd.f32 %v283, %v133
  %v285 = vadd.f32 %v284, %v136
  %v286 = vadd.f32 %v285, %v139
  %v287 = vadd.f32 %v286, %v142
  %v288 = vadd.f32 %v287, %v145
  %v289 = vadd.f32 %v288, %v148
  %v290 = vadd.f32 %v289, %v151
  %v291 = vadd.f32 %v290, %v154
  %v292 = vadd.f32 %v291, %v157
  %v293 = vadd.f32 %v292, %v160
  %v294 = vadd.f32 %v293, %v163
  %v295 = vadd.f32 %v294, %v166
  %v296 = vrot.slane %v295, 4
  %v297 = vadd.f32 %v295, %v296
  %v298 = vrot.slane %v297, 2
  %v299 = vadd.f32 %v297, %v298
  %v300 = vrot.slane %v299, 1
  %v301 = vadd.f32 %v299, %v300
  %v302 = vmul.f32 %v121, %v121
  %v303 = vmul.f32 %v124, %v124
  %v304 = vmul.f32 %v127, %v127
  %v305 = vmul.f32 %v130, %v130
  %v306 = vmul.f32 %v133, %v133
  %v307 = vmul.f32 %v136, %v136
  %v308 = vmul.f32 %v139, %v139
  %v309 = vmul.f32 %v142, %v142
  %v310 = vmul.f32 %v145, %v145
  %v311 = vmul.f32 %v148, %v148
  %v312 = vmul.f32 %v151, %v151
  %v313 = vmul.f32 %v154, %v154
  %v314 = vmul.f32 %v157, %v157
  %v315 = vmul.f32 %v160, %v160
  %v316 = vmul.f32 %v163, %v163
  %v317 = vmul.f32 %v166, %v166
  %v318 = vadd.f32 %v302, %v303
  %v319 = vadd.f32 %v318, %v304
  %v320 = vadd.f32 %v319, %v305
  %v321 = vadd.f32 %v320, %v306
  %v322 = vadd.f32 %v321, %v307
  %v323 = vadd.f32 %v322, %v308
  %v324 = vadd.f32 %v323, %v309
  %v325 = vadd.f32 %v324, %v310
  %v326 = vadd.f32 %v325, %v311
  %v327 = vadd.f32 %v326, %v312
  %v328 = vadd.f32 %v327, %v313
  %v329 = vadd.f32 %v328, %v314
  %v330 = vadd.f32 %v329, %v315
  %v331 = vadd.f32 %v330, %v316
  %v332 = vadd.f32 %v331, %v317
  %v333 = vrot.slane %v332, 4
  %v334 = vadd.f32 %v332, %v333
  %v335 = vrot.slane %v334, 2
  %v336 = vadd.f32 %v334, %v335
  %v337 = vrot.slane %v336, 1
  %v338 = vadd.f32 %v336, %v337
  %v339 = vadd.f32 %v202, %v205
  %v340 = vadd.f32 %v339, %v208
  %v341 = vadd.f32 %v340, %v211
  %v342 = vadd.f32 %v341, %v214
  %v343 = vadd.f32 %v342, %v217
  %v344 = vadd.f32 %v343, %v220
  %v345 = vadd.f32 %v344, %v223
  %v346 = vadd.f32 %v345, %v226
  %v347 = vadd.f32 %v346, %v229
  %v348 = vadd.f32 %v347, %v232
  %v349 = vadd.f32 %v348, %v235
  %v350 = vadd.f32 %v349, %v238
  %v351 = vadd.f32 %v350, %v241
  %v352 = vadd.f32 %v351, %v244
  %v353 = vadd.f32 %v352, %v247
  %v354 = vrot.slane %v353, 4
  %v355 = vadd.f32 %v353, %v354
  %v356 = vrot.slane %v355, 2
  %v357 = vadd.f32 %v355, %v356
  %v358 = vrot.slane %v357, 1
  %v359 = vadd.f32 %v357, %v358
  %v360 = vmul.f32 %v202, %v202
  %v361 = vmul.f32 %v205, %v205
  %v362 = vmul.f32 %v208, %v208
  %v363 = vmul.f32 %v211, %v211
  %v364 = vmul.f32 %v214, %v214
  %v365 = vmul.f32 %v217, %v217
  %v366 = vmul.f32 %v220, %v220
  %v367 = vmul.f32 %v223, %v223
  %v368 = vmul.f32 %v226, %v226
  %v369 = vmul.f32 %v229, %v229
  %v370 = vmul.f32 %v232, %v232
  %v371 = vmul.f32 %v235, %v235
  %v372 = vmul.f32 %v238, %v238
  %v373 = vmul.f32 %v241, %v241
  %v374 = vmul.f32 %v244, %v244
  %v375 = vmul.f32 %v247, %v247
  %v376 = vadd.f32 %v360, %v361
  %v377 = vadd.f32 %v376, %v362
  %v378 = vadd.f32 %v377, %v363
  %v379 = vadd.f32 %v378, %v364
  %v380 = vadd.f32 %v379, %v365
  %v381 = vadd.f32 %v380, %v366
  %v382 = vadd.f32 %v381, %v367
  %v383 = vadd.f32 %v382, %v368
  %v384 = vadd.f32 %v383, %v369
  %v385 = vadd.f32 %v384, %v370
  %v386 = vadd.f32 %v385, %v371
  %v387 = vadd.f32 %v386, %v372
  %v388 = vadd.f32 %v387, %v373
  %v389 = vadd.f32 %v388, %v374
  %v390 = vadd.f32 %v389, %v375
  %v391 = vrot.slane %v390, 4
  %v392 = vadd.f32 %v390, %v391
  %v393 = vrot.slane %v392, 2
  %v394 = vadd.f32 %v392, %v393
  %v395 = vrot.slane %v394, 1
  %v396 = vadd.f32 %v394, %v395
  %vm397 = vcmask 1040384
  %v398 = vsel %vm397, %v301, %v338
  %vm399 = vcmask 1041408
  %v400 = vsel %vm399, %v398, %v359
  %vm401 = vcmask 1042432
  %v402 = vsel %vm401, %v400, %v396
  %403 = vst [vmem:[%s6] sm:$0xf] %v402
  // Predicated region
  $region18: #{residual_block.4} parent=0 // pred_check
    _
  $region19: #{residual_block.4} parent=0 // pred_check_branch
    %405 = sbr.rel (0) target = $region21
  $region20: #{residual_block.4} parent=0 // pred_region
    _
  $region21: #{residual_block.4} parent=0 // pred_fallthru
    _
  // Predicated region
  $region22: #{residual_block.4} parent=0 // pred_check
    _
  $region23: #{residual_block.4} parent=0 // pred_check_branch
    %407 = sbr.rel (0) target = $region25
  $region24: #{residual_block.4} parent=0 // pred_region
    _
  $region25: #{residual_block.4} parent=0 // pred_fallthru
    _
  // Predicated region
  $region26: #{residual_block.4} parent=0 // pred_check
    _
  $region27: #{residual_block.4} parent=0 // pred_check_branch
    %409 = sbr.rel (0) target = $region29
  $region28: #{residual_block.4} parent=0 // pred_region
    _
  $region29: #{residual_block.4} parent=0 // pred_fallthru
    _
  // Predicated region
  $region30: #{residual_block.4} parent=0 // pred_check
    _
  $region31: #{residual_block.4} parent=0 // pred_check_branch
    %411 = sbr.rel (0) target = $region33
  $region32: #{residual_block.4} parent=0 // pred_region
    _
  $region33: #{residual_block.4} parent=0 // pred_fallthru
    _
  // Predicated region
  $region34: #{residual_block.4} parent=0 // pred_check
    _
  $region35: #{residual_block.4} parent=0 // pred_check_branch
    %413 = sbr.rel (0) target = $region37
  $region36: #{residual_block.4} parent=0 // pred_region
    _
  $region37: #{residual_block.4} parent=0 // pred_fallthru
    _
  // Predicated region
  $region38: #{residual_block.4} parent=0 // pred_check
    _
  $region39: #{residual_block.4} parent=0 // pred_check_branch
    %415 = sbr.rel (0) target = $region41
  $region40: #{residual_block.4} parent=0 // pred_region
    _
  $region41: #{residual_block.4} parent=0 // pred_fallthru
    _

// kernel: residual_block.5
$region0: #{residual_block.5}
  #allocation0 [shape = 'u32[]', space=smem, size = 0x4, offset = 0x4, fixed_abs, tag = 'smem constant byte address 0x4 - core index']
  #allocation1 [shape = 'u32[72,128]{1,0:T(1,128)}', space=vmem, size = 0x9000, scoped, tag = 'internal scratch']
  %s0 = inlined_call_operand.vmem [shape: f32[128,128], index: 0, kind: input, shape index: {}]
  %s1 = inlined_call_operand.vmem [shape: f32[128,128], index: 1, kind: input, shape index: {}]
  %s2 = inlined_call_operand.vmem [shape: f32[5,128], index: 2, kind: input, shape index: {}]
  %s3 = inlined_call_operand.vmem [shape: f32[128,128], index: 3, kind: input, shape index: {}]
  %s4 = inlined_call_operand.vmem [shape: f32[128,128], index: 4, kind: output, shape index: {}]
  %s5 = sld [smem:[#allocation0]]
  $region26: #{residual_block.5} parent=0
    _
  %s7 = ssub.s32 1, %s5
  %s8 = scalar_select 0, %s7, %s5
  // Predicated region
  $region2: #{residual_block.5} parent=0 // pred_check
    _
  $region3: #{residual_block.5} parent=0 // pred_check_branch
    %10 = sbr.rel (0) target = $region5
  $region4: #{residual_block.5} parent=0 // pred_region
    _
  $region5: #{residual_block.5} parent=0 // pred_fallthru
    _
  // Predicated region
  $region6: #{residual_block.5} parent=0 // pred_check
    _
  $region7: #{residual_block.5} parent=0 // pred_check_branch
    %12 = sbr.rel (0) target = $region9
  $region8: #{residual_block.5} parent=0 // pred_region
    _
  $region9: #{residual_block.5} parent=0 // pred_fallthru
    _
  // Predicated region
  $region10: #{residual_block.5} parent=0 // pred_check
    _
  $region11: #{residual_block.5} parent=0 // pred_check_branch
    %14 = sbr.rel (0) target = $region13
  $region12: #{residual_block.5} parent=0 // pred_region
    _
  $region13: #{residual_block.5} parent=0 // pred_fallthru
    _
  // Predicated region
  $region14: #{residual_block.5} parent=0 // pred_check
    _
  $region15: #{residual_block.5} parent=0 // pred_check_branch
    %16 = sbr.rel (0) target = $region17
  $region16: #{residual_block.5} parent=0 // pred_region
    _
  $region17: #{residual_block.5} parent=0 // pred_fallthru
    _
  %v17 = vld [vmem:[%s0] sm:$0xff]
  %v18 = vld [vmem:[%s0 + $0x8] sm:$0xff]
  %v19 = vld [vmem:[%s0 + $0x10] sm:$0xff]
  %v20 = vld [vmem:[%s0 + $0x18] sm:$0xff]
  %v21 = vld [vmem:[%s0 + $0x20] sm:$0xff]
  %v22 = vld [vmem:[%s0 + $0x28] sm:$0xff]
  %v23 = vld [vmem:[%s0 + $0x30] sm:$0xff]
  %v24 = vld [vmem:[%s0 + $0x38] sm:$0xff]
  %v25 = vld [vmem:[%s0 + $0x40] sm:$0xff]
  %v26 = vld [vmem:[%s0 + $0x48] sm:$0xff]
  %v27 = vld [vmem:[%s0 + $0x50] sm:$0xff]
  %v28 = vld [vmem:[%s0 + $0x58] sm:$0xff]
  %v29 = vld [vmem:[%s0 + $0x60] sm:$0xff]
  %v30 = vld [vmem:[%s0 + $0x68] sm:$0xff]
  %v31 = vld [vmem:[%s0 + $0x70] sm:$0xff]
  %v32 = vld [vmem:[%s0 + $0x78] sm:$0xff]
  %v33 = vld [vmem:[%s1] sm:$0xff]
  %v34 = vld [vmem:[%s1 + $0x8] sm:$0xff]
  %v35 = vld [vmem:[%s1 + $0x10] sm:$0xff]
  %v36 = vld [vmem:[%s1 + $0x18] sm:$0xff]
  %v37 = vld [vmem:[%s1 + $0x20] sm:$0xff]
  %v38 = vld [vmem:[%s1 + $0x28] sm:$0xff]
  %v39 = vld [vmem:[%s1 + $0x30] sm:$0xff]
  %v40 = vld [vmem:[%s1 + $0x38] sm:$0xff]
  %v41 = vld [vmem:[%s1 + $0x40] sm:$0xff]
  %v42 = vld [vmem:[%s1 + $0x48] sm:$0xff]
  %v43 = vld [vmem:[%s1 + $0x50] sm:$0xff]
  %v44 = vld [vmem:[%s1 + $0x58] sm:$0xff]
  %v45 = vld [vmem:[%s1 + $0x60] sm:$0xff]
  %v46 = vld [vmem:[%s1 + $0x68] sm:$0xff]
  %v47 = vld [vmem:[%s1 + $0x70] sm:$0xff]
  %v48 = vld [vmem:[%s1 + $0x78] sm:$0xff]
  %v49 = vld [vmem:[%s2] sm:$0x1f]
  %v50 = vperm.slane %v49, 0
  %v51 = vmul.f32 %v17, %v50
  %v52 = vmul.f32 %v18, %v50
  %v53 = vmul.f32 %v19, %v50
  %v54 = vmul.f32 %v20, %v50
  %v55 = vmul.f32 %v21, %v50
  %v56 = vmul.f32 %v22, %v50
  %v57 = vmul.f32 %v23, %v50
  %v58 = vmul.f32 %v24, %v50
  %v59 = vmul.f32 %v25, %v50
  %v60 = vmul.f32 %v26, %v50
  %v61 = vmul.f32 %v27, %v50
  %v62 = vmul.f32 %v28, %v50
  %v63 = vmul.f32 %v29, %v50
  %v64 = vmul.f32 %v30, %v50
  %v65 = vmul.f32 %v31, %v50
  %v66 = vmul.f32 %v32, %v50
  %v67 = vperm.slane %v49, 1
  %v68 = vadd.f32 %v51, %v67
  %v69 = vadd.f32 %v52, %v67
  %v70 = vadd.f32 %v53, %v67
  %v71 = vadd.f32 %v54, %v67
  %v72 = vadd.f32 %v55, %v67
  %v73 = vadd.f32 %v56, %v67
  %v74 = vadd.f32 %v57, %v67
  %v75 = vadd.f32 %v58, %v67
  %v76 = vadd.f32 %v59, %v67
  %v77 = vadd.f32 %v60, %v67
  %v78 = vadd.f32 %v61, %v67
  %v79 = vadd.f32 %v62, %v67
  %v80 = vadd.f32 %v63, %v67
  %v81 = vadd.f32 %v64, %v67
  %v82 = vadd.f32 %v65, %v67
  %v83 = vadd.f32 %v66, %v67
  %v84 = vmax.f32 %v68, 0.0
  %v85 = vmax.f32 %v69, 0.0
  %v86 = vmax.f32 %v70, 0.0
  %v87 = vmax.f32 %v71, 0.0
  %v88 = vmax.f32 %v72, 0.0
  %v89 = vmax.f32 %v73, 0.0
  %v90 = vmax.f32 %v74, 0.0
  %v91 = vmax.f32 %v75, 0.0
  %v92 = vmax.f32 %v76, 0.0
  %v93 = vmax.f32 %v77, 0.0
  %v94 = vmax.f32 %v78, 0.0
  %v95 = vmax.f32 %v79, 0.0
  %v96 = vmax.f32 %v80, 0.0
  %v97 = vmax.f32 %v81, 0.0
  %v98 = vmax.f32 %v82, 0.0
  %v99 = vmax.f32 %v83, 0.0
  %v100 = vld [vmem:[%s3] sm:$0xff]
  %v101 = vld [vmem:[%s3 + $0x8] sm:$0xff]
  %v102 = vld [vmem:[%s3 + $0x10] sm:$0xff]
  %v103 = vld [vmem:[%s3 + $0x18] sm:$0xff]
  %v104 = vld [vmem:[%s3 + $0x20] sm:$0xff]
  %v105 = vld [vmem:[%s3 + $0x28] sm:$0xff]
  %v106 = vld [vmem:[%s3 + $0x30] sm:$0xff]
  %v107 = vld [vmem:[%s3 + $0x38] sm:$0xff]
  %v108 = vld [vmem:[%s3 + $0x40] sm:$0xff]
  %v109 = vld [vmem:[%s3 + $0x48] sm:$0xff]
  %v110 = vld [vmem:[%s3 + $0x50] sm:$0xff]
  %v111 = vld [vmem:[%s3 + $0x58] sm:$0xff]
  %v112 = vld [vmem:[%s3 + $0x60] sm:$0xff]
  %v113 = vld [vmem:[%s3 + $0x68] sm:$0xff]
  %v114 = vld [vmem:[%s3 + $0x70] sm:$0xff]
  %v115 = vld [vmem:[%s3 + $0x78] sm:$0xff]
  %v116 = vperm.slane %v49, 4
  %117 = vmatpush.msra.mxu0 %v115
  %118 = vmatpush.msra.mxu0 %v114
  %119 = vmatpush.msra.mxu0 %v113
  %120 = vmatpush.msra.mxu0 %v112
  %121 = vmatpush.msra.mxu0 %v111
  %122 = vmatpush.msra.mxu0 %v110
  %123 = vmatpush.msra.mxu0 %v109
  %124 = vmatpush.msra.mxu0 %v108
  %125 = vmatpush.msra.mxu0 %v107
  %126 = vmatpush.msra.mxu0 %v106
  %127 = vmatpush.msra.mxu0 %v105
  %128 = vmatpush.msra.mxu0 %v104
  %129 = vmatpush.msra.mxu0 %v103
  %130 = vmatpush.msra.mxu0 %v102
  %131 = vmatpush.msra.mxu0 %v101
  %132 = vmatpush.msra.mxu0 %v100
  %133 = vmatmul.f32.gmra.mxu0 %v84
  %v134 = vpop.f32.mrf.mxu0
  %v135 = vadd.f32 %v116, %v134
  %136 = vmatmul.f32.gmra.mxu0 %v85
  %v137 = vpop.f32.mrf.mxu0
  %v138 = vadd.f32 %v116, %v137
  %139 = vmatmul.f32.gmra.mxu0 %v86
  %v140 = vpop.f32.mrf.mxu0
  %v141 = vadd.f32 %v116, %v140
  %142 = vmatmul.f32.gmra.mxu0 %v87
  %v143 = vpop.f32.mrf.mxu0
  %v144 = vadd.f32 %v116, %v143
  %145 = vmatmul.f32.gmra.mxu0 %v88
  %v146 = vpop.f32.mrf.mxu0
  %v147 = vadd.f32 %v116, %v146
  %148 = vmatmul.f32.gmra.mxu0 %v89
  %v149 = vpop.f32.mrf.mxu0
  %v150 = vadd.f32 %v116, %v149
  %151 = vmatmul.f32.gmra.mxu0 %v90
  %v152 = vpop.f32.mrf.mxu0
  %v153 = vadd.f32 %v116, %v152
  %154 = vmatmul.f32.gmra.mxu0 %v91
  %v155 = vpop.f32.mrf.mxu0
  %v156 = vadd.f32 %v116, %v155
  %157 = vmatmul.f32.gmra.mxu0 %v92
  %v158 = vpop.f32.mrf.mxu0
  %v159 = vadd.f32 %v116, %v158
  %160 = vmatmul.f32.gmra.mxu0 %v93
  %v161 = vpop.f32.mrf.mxu0
  %v162 = vadd.f32 %v116, %v161
  %163 = vmatmul.f32.gmra.mxu0 %v94
  %v164 = vpop.f32.mrf.mxu0
  %v165 = vadd.f32 %v116, %v164
  %166 = vmatmul.f32.gmra.mxu0 %v95
  %v167 = vpop.f32.mrf.mxu0
  %v168 = vadd.f32 %v116, %v167
  %169 = vmatmul.f32.gmra.mxu0 %v96
  %v170 = vpop.f32.mrf.mxu0
  %v171 = vadd.f32 %v116, %v170
  %172 = vmatmul.f32.gmra.mxu0 %v97
  %v173 = vpop.f32.mrf.mxu0
  %v174 = vadd.f32 %v116, %v173
  %175 = vmatmul.f32.gmra.mxu0 %v98
  %v176 = vpop.f32.mrf.mxu0
  %v177 = vadd.f32 %v116, %v176
  %178 = vmatmul.f32.gmra.mxu0 %v99
  %v179 = vpop.f32.mrf.mxu0
  %v180 = vadd.f32 %v116, %v179
  %181 = vdwg.mxu0
  %v182 = vperm.slane %v49, 2
  %v183 = vmul.f32 %v33, %v182
  %v184 = vmul.f32 %v34, %v182
  %v185 = vmul.f32 %v35, %v182
  %v186 = vmul.f32 %v36, %v182
  %v187 = vmul.f32 %v37, %v182
  %v188 = vmul.f32 %v38, %v182
  %v189 = vmul.f32 %v39, %v182
  %v190 = vmul.f32 %v40, %v182
  %v191 = vmul.f32 %v41, %v182
  %v192 = vmul.f32 %v42, %v182
  %v193 = vmul.f32 %v43, %v182
  %v194 = vmul.f32 %v44, %v182
  %v195 = vmul.f32 %v45, %v182
  %v196 = vmul.f32 %v46, %v182
  %v197 = vmul.f32 %v47, %v182
  %v198 = vmul.f32 %v48, %v182
  %v199 = vadd.f32 %v135, %v183
  %v200 = vadd.f32 %v138, %v184
  %v201 = vadd.f32 %v141, %v185
  %v202 = vadd.f32 %v144, %v186
  %v203 = vadd.f32 %v147, %v187
  %v204 = vadd.f32 %v150, %v188
  %v205 = vadd.f32 %v153, %v189
  %v206 = vadd.f32 %v156, %v190
  %v207 = vadd.f32 %v159, %v191
  %v208 = vadd.f32 %v162, %v192
  %v209 = vadd.f32 %v165, %v193
  %v210 = vadd.f32 %v168, %v194
  %v211 = vadd.f32 %v171, %v195
  %v212 = vadd.f32 %v174, %v196
  %v213 = vadd.f32 %v177, %v197
  %v214 = vadd.f32 %v180, %v198
  %v215 = vperm.slane %v49, 3
  %v216 = vadd.f32 %v199, %v215
  %v217 = vadd.f32 %v200, %v215
  %v218 = vadd.f32 %v201, %v215
  %v219 = vadd.f32 %v202, %v215
  %v220 = vadd.f32 %v203, %v215
  %v221 = vadd.f32 %v204, %v215
  %v222 = vadd.f32 %v205, %v215
  %v223 = vadd.f32 %v206, %v215
  %v224 = vadd.f32 %v207, %v215
  %v225 = vadd.f32 %v208, %v215
  %v226 = vadd.f32 %v209, %v215
  %v227 = vadd.f32 %v210, %v215
  %v228 = vadd.f32 %v211, %v215
  %v229 = vadd.f32 %v212, %v215
  %v230 = vadd.f32 %v213, %v215
  %v231 = vadd.f32 %v214, %v215
  %232 = vst [vmem:[%s4] sm:$0xff] %v216
  %233 = vst [vmem:[%s4 + $0x8] sm:$0xff] %v217
  %234 = vst [vmem:[%s4 + $0x10] sm:$0xff] %v218
  %235 = vst [vmem:[%s4 + $0x18] sm:$0xff] %v219
  %236 = vst [vmem:[%s4 + $0x20] sm:$0xff] %v220
  %237 = vst [vmem:[%s4 + $0x28] sm:$0xff] %v221
  %238 = vst [vmem:[%s4 + $0x30] sm:$0xff] %v222
  %239 = vst [vmem:[%s4 + $0x38] sm:$0xff] %v223
  %240 = vst [vmem:[%s4 + $0x40] sm:$0xff] %v224
  %241 = vst [vmem:[%s4 + $0x48] sm:$0xff] %v225
  %242 = vst [vmem:[%s4 + $0x50] sm:$0xff] %v226
  %243 = vst [vmem:[%s4 + $0x58] sm:$0xff] %v227
  %244 = vst [vmem:[%s4 + $0x60] sm:$0xff] %v228
  %245 = vst [vmem:[%s4 + $0x68] sm:$0xff] %v229
  %246 = vst [vmem:[%s4 + $0x70] sm:$0xff] %v230
  %247 = vst [vmem:[%s4 + $0x78] sm:$0xff] %v231
  // Predicated region
  $region18: #{residual_block.5} parent=0 // pred_check
    _
  $region19: #{residual_block.5} parent=0 // pred_check_branch
    %249 = sbr.rel (0) target = $region21
  $region20: #{residual_block.5} parent=0 // pred_region
    _
  $region21: #{residual_block.5} parent=0 // pred_fallthru
    _
  // Predicated region
  $region22: #{residual_block.5} parent=0 // pred_check
    _
  $region23: #{residual_block.5} parent=0 // pred_check_branch
    %251 = sbr.rel (0) target = $region25
  $region24: #{residual_block.5} parent=0 // pred_region
    _
  $region25: #{residual_block.5} parent=0 // pred_fallthru
    _

</llo_original>
